<compile_context>
chip_gen: v7x
topology: tpu7x:2x2x1
jax: 0.10.0
libtpu: 0.0.40
codegen_flags: <defaults>
</compile_context>

<pallas_src>
import jax
import jax.numpy as jnp
from jax.experimental import pallas as pl
from jax.experimental.pallas import tpu as pltpu


def _round_up(x, m):
    return (x + m - 1) // m * m


def _make_fcnn_kernel(num_layers):
    """Kernel over one batch tile.

    Ref order: x_ref [TM, in], then (w_ref [out, in], b_ref [out, 1]) per layer,
    then o_ref [out_dim, TM] (lane-dense output).
    """

    def kernel(*refs):
        x_ref, o_ref = refs[0], refs[-1]
        wb = refs[1:-1]

        # Layer 1: contract the feature axis of both operands -> [h0, TM].
        x = x_ref[...].astype(jnp.bfloat16)
        h = jax.lax.dot_general(
            wb[0][...], x, (((1,), (1,)), ((), ())),
            preferred_element_type=jnp.float32,
        ) + wb[1][...]
        h = jnp.tanh(h)

        # Remaining layers: standard [out, in] @ [in, TM] matmuls.
        for layer in range(1, num_layers):
            w = wb[2 * layer][...]
            b = wb[2 * layer + 1][...]
            h = jnp.tanh(
                jnp.dot(w, h.astype(jnp.bfloat16),
                        preferred_element_type=jnp.float32) + b
            )

        o_ref[...] = h.astype(o_ref.dtype)

    return kernel


def fcnn_forward(x, params, input_shape, *, block_rows=4096):
    """Equivalent to FCNN.forward: x.view(-1, input_shape) -> N x (Linear+Tanh)."""
    params = tuple(params)
    assert len(params) >= 2 and len(params) % 2 == 0
    ws = params[0::2]          # PyTorch-native [out, in]
    bs = params[1::2]          # [out, 1]
    num_layers = len(ws)
    out_dim = ws[-1].shape[0]

    x2d = x.reshape(-1, input_shape)            # same semantics as torch .view
    n = x2d.shape[0]

    # Batch tile: multiple of 128 (lane-dense on the output side).  Pad the
    # batch axis; padding is sliced off after the call.
    tm = min(block_rows, _round_up(max(n, 1), 128))
    n_pad = _round_up(n, tm)
    if n_pad != n:
        x2d = jnp.pad(x2d, ((0, n_pad - n), (0, 0)))

    # bf16 MXU operands (cast once); biases / accumulation / tanh stay f32.
    ws_bf = [w.astype(jnp.bfloat16) for w in ws]

    dims = [input_shape] + [w.shape[0] for w in ws]
    flops = 2 * n_pad * sum(dims[i] * dims[i + 1] for i in range(num_layers))
    transcendentals = n_pad * sum(dims[1:])
    bytes_accessed = (
        x2d.size * x2d.dtype.itemsize
        + n_pad * out_dim * 4
        + sum(w.size * 2 + b.size * 4 for w, b in zip(ws_bf, bs))
    )

    const_spec = lambda shape: pl.BlockSpec(shape, lambda i: (0, 0))
    in_specs = [pl.BlockSpec((tm, input_shape), lambda i: (i, 0))]
    operands = [x2d]
    for w, b in zip(ws_bf, bs):
        in_specs += [const_spec(w.shape), const_spec(b.shape)]
        operands += [w, b]

    out_t = pl.pallas_call(
        _make_fcnn_kernel(num_layers),
        out_shape=jax.ShapeDtypeStruct((out_dim, n_pad), jnp.float32),
        grid_spec=pltpu.PrefetchScalarGridSpec(
            num_scalar_prefetch=0,
            grid=(n_pad // tm,),
            in_specs=in_specs,
            out_specs=pl.BlockSpec((out_dim, tm), lambda i: (0, i)),
        ),
        compiler_params=pltpu.CompilerParams(
            dimension_semantics=("parallel",),
        ),
        cost_estimate=pl.CostEstimate(
            flops=flops,
            transcendentals=transcendentals,
            bytes_accessed=bytes_accessed,
        ),
    )(*operands)

    # Back to PyTorch orientation [n, out_dim]; the transposed slab only has
    # out_dim rows, so this wrapper transpose is negligible layout plumbing.
    return out_t[:, :n].T


def init_fcnn_params(key, input_shape, output_shape, hidden_shape=(30, 30)):
    """nn.Linear-style U(-1/sqrt(fan_in), 1/sqrt(fan_in)); weights [out, in], biases [out, 1]."""
    dims = [input_shape, *hidden_shape, output_shape]
    params = []
    for i in range(len(dims) - 1):
        fan_in, fan_out = dims[i], dims[i + 1]
        key, kw, kb = jax.random.split(key, 3)
        bound = 1.0 / float(fan_in) ** 0.5
        w = jax.random.uniform(kw, (fan_out, fan_in), jnp.float32, -bound, bound)
        b = jax.random.uniform(kb, (fan_out, 1), jnp.float32, -bound, bound)
        params.extend([w, b])
    return tuple(params)


if __name__ == "__main__":
    INPUT_SHAPE = 16
    OUTPUT_SHAPE = 4
    HIDDEN_SHAPE = (30, 30)

    key = jax.random.PRNGKey(0)
    k_x, k_p = jax.random.split(key)

    # Example input: (2, 4, 16) -> viewed as (-1, 16) = (8, 16) inside forward.
    x = jax.random.normal(k_x, (2, 4, INPUT_SHAPE), dtype=jnp.float32)
    params = init_fcnn_params(k_p, INPUT_SHAPE, OUTPUT_SHAPE, HIDDEN_SHAPE)

    out = fcnn_forward(x, params, INPUT_SHAPE)
    out = jax.block_until_ready(out)

    # References.
    w1, b1, w2, b2, w3, b3 = params
    x2d = x.reshape(-1, INPUT_SHAPE)

    # Full-f32 reference (PyTorch-equivalent math).
    ref_f32 = jnp.tanh(
        jnp.tanh(jnp.tanh(x2d @ w1.T + b1.T) @ w2.T + b2.T) @ w3.T + b3.T
    )

    # Reference mirroring the kernel's bf16 MXU operands / f32 accumulation.
    bf = jnp.bfloat16
    h = jnp.tanh(jnp.dot(x2d.astype(bf), w1.T.astype(bf),
                         preferred_element_type=jnp.float32) + b1.T)
    h = jnp.tanh(jnp.dot(h.astype(bf), w2.T.astype(bf),
                         preferred_element_type=jnp.float32) + b2.T)
    ref_bf16 = jnp.tanh(jnp.dot(h.astype(bf), w3.T.astype(bf),
                                preferred_element_type=jnp.float32) + b3.T)

    assert out.shape == (8, OUTPUT_SHAPE)
    assert jnp.allclose(out, ref_bf16, atol=1e-3), "mismatch vs bf16-matched reference"
    assert jnp.allclose(out, ref_f32, atol=5e-2), "mismatch vs f32 reference"

    print("KERNEL_OK")
</pallas_src>

<mosaic_0001>
module attributes {stable_mosaic.version = 11 : i64} {
  func.func @kernel(%arg0: i32, %arg1: memref<128x16xf32, #tpu.memory_space<vmem>>, %arg2: memref<30x16xbf16, #tpu.memory_space<vmem>>, %arg3: memref<30x1xf32, #tpu.memory_space<vmem>>, %arg4: memref<30x30xbf16, #tpu.memory_space<vmem>>, %arg5: memref<30x1xf32, #tpu.memory_space<vmem>>, %arg6: memref<4x30xbf16, #tpu.memory_space<vmem>>, %arg7: memref<4x1xf32, #tpu.memory_space<vmem>>, %arg8: memref<4x128xf32, #tpu.memory_space<vmem>>) attributes {dimension_semantics = [#tpu.dimension_semantics<parallel>], iteration_bounds = array<i64: 1>, scalar_prefetch = 0 : i64, scratch_operands = 0 : i64, tpu.core_type = #tpu.core_type<tc>, window_params = [{transform_indices = @transform_0, window_bounds = array<i64: 128, 16>}, {pipeline_mode = #tpu.pipeline_mode<synchronous>, transform_indices = @transform_1, window_bounds = array<i64: 30, 16>}, {pipeline_mode = #tpu.pipeline_mode<synchronous>, transform_indices = @transform_2, window_bounds = array<i64: 30, 1>}, {pipeline_mode = #tpu.pipeline_mode<synchronous>, transform_indices = @transform_3, window_bounds = array<i64: 30, 30>}, {pipeline_mode = #tpu.pipeline_mode<synchronous>, transform_indices = @transform_4, window_bounds = array<i64: 30, 1>}, {pipeline_mode = #tpu.pipeline_mode<synchronous>, transform_indices = @transform_5, window_bounds = array<i64: 4, 30>}, {pipeline_mode = #tpu.pipeline_mode<synchronous>, transform_indices = @transform_6, window_bounds = array<i64: 4, 1>}, {transform_indices = @transform_7, window_bounds = array<i64: 4, 128>}]} {
    %c0 = arith.constant 0 : index
    %c0_0 = arith.constant 0 : index
    %0 = vector.load %arg1[%c0, %c0_0] : memref<128x16xf32, #tpu.memory_space<vmem>>, vector<128x16xf32>
    %1 = arith.truncf %0 : vector<128x16xf32> to vector<128x16xbf16>
    %c0_1 = arith.constant 0 : index
    %c0_2 = arith.constant 0 : index
    %2 = vector.load %arg2[%c0_1, %c0_2] : memref<30x16xbf16, #tpu.memory_space<vmem>>, vector<30x16xbf16>
    %cst = arith.constant dense<0.000000e+00> : vector<30x128xf32>
    %3 = tpu.matmul %2, %1, %cst {dimension_numbers = #tpu.dot_dimension_numbers<[1], [1], [0], [0], [0, 0, 1, 0], [], []>} : vector<30x16xbf16>, vector<128x16xbf16>, vector<30x128xf32> -> vector<30x128xf32>
    %c0_3 = arith.constant 0 : index
    %c0_4 = arith.constant 0 : index
    %4 = vector.load %arg3[%c0_3, %c0_4] : memref<30x1xf32, #tpu.memory_space<vmem>>, vector<30x1xf32>
    %5 = vector.broadcast %4 : vector<30x1xf32> to vector<30x128xf32>
    %6 = arith.addf %3, %5 : vector<30x128xf32>
    %7 = math.tanh %6 : vector<30x128xf32>
    %c0_5 = arith.constant 0 : index
    %c0_6 = arith.constant 0 : index
    %8 = vector.load %arg4[%c0_5, %c0_6] : memref<30x30xbf16, #tpu.memory_space<vmem>>, vector<30x30xbf16>
    %c0_7 = arith.constant 0 : index
    %c0_8 = arith.constant 0 : index
    %9 = vector.load %arg5[%c0_7, %c0_8] : memref<30x1xf32, #tpu.memory_space<vmem>>, vector<30x1xf32>
    %10 = arith.truncf %7 : vector<30x128xf32> to vector<30x128xbf16>
    %cst_9 = arith.constant dense<0.000000e+00> : vector<30x128xf32>
    %11 = tpu.matmul %8, %10, %cst_9 {dimension_numbers = #tpu.dot_dimension_numbers<[1], [0], [0], [1], [0, 0, 1, 1], [], []>} : vector<30x30xbf16>, vector<30x128xbf16>, vector<30x128xf32> -> vector<30x128xf32>
    %12 = vector.broadcast %9 : vector<30x1xf32> to vector<30x128xf32>
    %13 = arith.addf %11, %12 : vector<30x128xf32>
    %14 = math.tanh %13 : vector<30x128xf32>
    %c0_10 = arith.constant 0 : index
    %c0_11 = arith.constant 0 : index
    %15 = vector.load %arg6[%c0_10, %c0_11] : memref<4x30xbf16, #tpu.memory_space<vmem>>, vector<4x30xbf16>
    %c0_12 = arith.constant 0 : index
    %c0_13 = arith.constant 0 : index
    %16 = vector.load %arg7[%c0_12, %c0_13] : memref<4x1xf32, #tpu.memory_space<vmem>>, vector<4x1xf32>
    %17 = arith.truncf %14 : vector<30x128xf32> to vector<30x128xbf16>
    %cst_14 = arith.constant dense<0.000000e+00> : vector<4x128xf32>
    %18 = tpu.matmul %15, %17, %cst_14 {dimension_numbers = #tpu.dot_dimension_numbers<[1], [0], [0], [1], [0, 0, 1, 1], [], []>} : vector<4x30xbf16>, vector<30x128xbf16>, vector<4x128xf32> -> vector<4x128xf32>
    %19 = vector.broadcast %16 : vector<4x1xf32> to vector<4x128xf32>
    %20 = arith.addf %18, %19 : vector<4x128xf32>
    %21 = math.tanh %20 : vector<4x128xf32>
    %c0_15 = arith.constant 0 : index
    %c0_16 = arith.constant 0 : index
    %22 = vector.load %arg8[%c0_15, %c0_16] : memref<4x128xf32, #tpu.memory_space<vmem>>, vector<4x128xf32>
    tpu.vector_store %arg8[%c0_15, %c0_16], %21 {strides = array<i32>} : memref<4x128xf32, #tpu.memory_space<vmem>>, vector<4x128xf32>,
    return
  }
  func.func @transform_0(%arg0: i32) -> (i32, i32) {
    %c0_i32 = arith.constant 0 : i32
    %c0_i32_0 = arith.constant 0 : i32
    return %arg0, %c0_i32 : i32, i32
  }
  func.func @transform_1(%arg0: i32) -> (i32, i32) {
    %c0_i32 = arith.constant 0 : i32
    %c0_i32_0 = arith.constant 0 : i32
    %c0_i32_1 = arith.constant 0 : i32
    return %c0_i32, %c0_i32_0 : i32, i32
  }
  func.func @transform_2(%arg0: i32) -> (i32, i32) {
    %c0_i32 = arith.constant 0 : i32
    %c0_i32_0 = arith.constant 0 : i32
    %c0_i32_1 = arith.constant 0 : i32
    return %c0_i32, %c0_i32_0 : i32, i32
  }
  func.func @transform_3(%arg0: i32) -> (i32, i32) {
    %c0_i32 = arith.constant 0 : i32
    %c0_i32_0 = arith.constant 0 : i32
    %c0_i32_1 = arith.constant 0 : i32
    return %c0_i32, %c0_i32_0 : i32, i32
  }
  func.func @transform_4(%arg0: i32) -> (i32, i32) {
    %c0_i32 = arith.constant 0 : i32
    %c0_i32_0 = arith.constant 0 : i32
    %c0_i32_1 = arith.constant 0 : i32
    return %c0_i32, %c0_i32_0 : i32, i32
  }
  func.func @transform_5(%arg0: i32) -> (i32, i32) {
    %c0_i32 = arith.constant 0 : i32
    %c0_i32_0 = arith.constant 0 : i32
    %c0_i32_1 = arith.constant 0 : i32
    return %c0_i32, %c0_i32_0 : i32, i32
  }
  func.func @transform_6(%arg0: i32) -> (i32, i32) {
    %c0_i32 = arith.constant 0 : i32
    %c0_i32_0 = arith.constant 0 : i32
    %c0_i32_1 = arith.constant 0 : i32
    return %c0_i32, %c0_i32_0 : i32, i32
  }
  func.func @transform_7(%arg0: i32) -> (i32, i32) {
    %c0_i32 = arith.constant 0 : i32
    %c0_i32_0 = arith.constant 0 : i32
    return %c0_i32, %arg0 : i32, i32
  }
}

</mosaic_0001>

<llo_original>
// kernel: tpu_custom_call.1
$region0: #{tpu_custom_call.1}
  #allocation0 [shape = 'u32[]', space=smem, size = 0x4, offset = 0x4, fixed_abs, tag = 'smem constant byte address 0x4 - core index']
  #allocation1 [shape = 'u32[144,128]{1,0:T(1,128)}', space=vmem, size = 0x12000, scoped, tag = 'internal scratch']
  %s0 = inlined_call_operand.vmem [shape: f32[128,16], index: 0, kind: input, shape index: {}]
  %s1 = inlined_call_operand.vmem [shape: bf16[30,16], index: 1, kind: input, shape index: {}]
  %s2 = inlined_call_operand.vmem [shape: f32[30,1], index: 2, kind: input, shape index: {}]
  %s3 = inlined_call_operand.vmem [shape: bf16[30,30], index: 3, kind: input, shape index: {}]
  %s4 = inlined_call_operand.vmem [shape: f32[30,1], index: 4, kind: input, shape index: {}]
  %s5 = inlined_call_operand.vmem [shape: bf16[4,30], index: 5, kind: input, shape index: {}]
  %s6 = inlined_call_operand.vmem [shape: f32[4,1], index: 6, kind: input, shape index: {}]
  %s7 = inlined_call_operand.hbm [shape: f32[4,128], index: 7, kind: output, shape index: {}]
  %s8 = sld [smem:[#allocation0]]
  $region38: #{tpu_custom_call.1} parent=0
    _
  %s10 = ssub.s32 1, %s8
  %s11 = scalar_select 0, %s10, %s8
  $region1: #{tpu_custom_call.1} parent=0
    #allocation2 [shape = 'u8[2048]{0}', space=vmem, size = 0x800, scoped, tag = 'output window, operand 0, single buffered']
    #allocation3 [shape = 's32[1]{0}', space=sflag, size = 0x4, scoped, tag = 'scoped memory for tpu_custom_call.1']
    %12 = vsyncpa [#allocation3], 0
    // Predicated region
    $region2: #{tpu_custom_call.1} parent=1 // pred_check
      _
    $region3: #{tpu_custom_call.1} parent=1 // pred_check_branch
      %14 = sbr.rel (0) target = $region5
    $region4: #{tpu_custom_call.1} parent=1 // pred_region
      _
    $region5: #{tpu_custom_call.1} parent=1 // pred_fallthru
      _
    // Predicated region
    $region6: #{tpu_custom_call.1} parent=1 // pred_check
      _
    $region7: #{tpu_custom_call.1} parent=1 // pred_check_branch
      %16 = sbr.rel (0) target = $region9
    $region8: #{tpu_custom_call.1} parent=1 // pred_region
      _
    $region9: #{tpu_custom_call.1} parent=1 // pred_fallthru
      _
    // Predicated region
    $region10: #{tpu_custom_call.1} parent=1 // pred_check
      _
    $region11: #{tpu_custom_call.1} parent=1 // pred_check_branch
      %18 = sbr.rel (0) target = $region13
    $region12: #{tpu_custom_call.1} parent=1 // pred_region
      _
    $region13: #{tpu_custom_call.1} parent=1 // pred_fallthru
      _
    // Predicated region
    $region14: #{tpu_custom_call.1} parent=1 // pred_check
      _
    $region15: #{tpu_custom_call.1} parent=1 // pred_check_branch
      %20 = sbr.rel (0) target = $region17
    $region16: #{tpu_custom_call.1} parent=1 // pred_region
      _
    $region17: #{tpu_custom_call.1} parent=1 // pred_fallthru
      _
    // Predicated region
    $region18: #{tpu_custom_call.1} parent=1 // pred_check
      _
    $region19: #{tpu_custom_call.1} parent=1 // pred_check_branch
      %22 = sbr.rel (0) target = $region21
    $region20: #{tpu_custom_call.1} parent=1 // pred_region
      _
    $region21: #{tpu_custom_call.1} parent=1 // pred_fallthru
      _
    // Predicated region
    $region22: #{tpu_custom_call.1} parent=1 // pred_check
      _
    $region23: #{tpu_custom_call.1} parent=1 // pred_check_branch
      %24 = sbr.rel (0) target = $region25
    $region24: #{tpu_custom_call.1} parent=1 // pred_region
      _
    $region25: #{tpu_custom_call.1} parent=1 // pred_fallthru
      _
    // Predicated region
    $region26: #{tpu_custom_call.1} parent=1 // pred_check
      _
    $region27: #{tpu_custom_call.1} parent=1 // pred_check_branch
      %26 = sbr.rel (0) target = $region29
    $region28: #{tpu_custom_call.1} parent=1 // pred_region
      _
    $region29: #{tpu_custom_call.1} parent=1 // pred_fallthru
      _
    %v28 = vld [vmem:[%s0] sm:$0xff]
    %v29 = vld [vmem:[%s0 + $0x8] sm:$0xff]
    %v30 = vld [vmem:[%s0 + $0x10] sm:$0xff]
    %v31 = vld [vmem:[%s0 + $0x18] sm:$0xff]
    %v32 = vld [vmem:[%s0 + $0x20] sm:$0xff]
    %v33 = vld [vmem:[%s0 + $0x28] sm:$0xff]
    %v34 = vld [vmem:[%s0 + $0x30] sm:$0xff]
    %v35 = vld [vmem:[%s0 + $0x38] sm:$0xff]
    %v36 = vld [vmem:[%s0 + $0x40] sm:$0xff]
    %v37 = vld [vmem:[%s0 + $0x48] sm:$0xff]
    %v38 = vld [vmem:[%s0 + $0x50] sm:$0xff]
    %v39 = vld [vmem:[%s0 + $0x58] sm:$0xff]
    %v40 = vld [vmem:[%s0 + $0x60] sm:$0xff]
    %v41 = vld [vmem:[%s0 + $0x68] sm:$0xff]
    %v42 = vld [vmem:[%s0 + $0x70] sm:$0xff]
    %v43 = vld [vmem:[%s0 + $0x78] sm:$0xff]
    %v44 = vpack.c.bf16 %v29, %v28
    %v45 = vpack.c.bf16 %v31, %v30
    %v46 = vpack.c.bf16 %v33, %v32
    %v47 = vpack.c.bf16 %v35, %v34
    %v48 = vpack.c.bf16 %v37, %v36
    %v49 = vpack.c.bf16 %v39, %v38
    %v50 = vpack.c.bf16 %v41, %v40
    %v51 = vpack.c.bf16 %v43, %v42
    %v52 = vld [vmem:[%s1] sm:$0xf]
    %v53 = vld [vmem:[%s1 + $0x4] sm:$0xf]
    %v54 = vld [vmem:[%s1 + $0x8] sm:$0xf]
    %v55 = vld [vmem:[%s1 + $0xc] sm:$0x7]
    %v56 = vld [vmem:[%s2] sm:$0xff]
    %v57 = vld [vmem:[%s2 + $0x8] sm:$0xff]
    %v58 = vld [vmem:[%s2 + $0x10] sm:$0xff]
    %v59 = vld [vmem:[%s2 + $0x18] sm:$0x3f]
    %61 = vset.pattern.permute.xlu0 0
    %62 = vperm.xlu0 %61, %v56
    %v63 = vpop.permute.xlu0 %62
    %66 = vset.pattern.permute.xlu0 0
    %67 = vperm.xlu0 %66, %v57
    %v68 = vpop.permute.xlu0 %67
    %71 = vset.pattern.permute.xlu0 0
    %72 = vperm.xlu0 %71, %v58
    %v73 = vpop.permute.xlu0 %72
    %76 = vset.pattern.permute.xlu0 0
    %77 = vperm.xlu0 %76, %v59
    %v78 = vpop.permute.xlu0 %77
    %v84 = vunpack.c.l.b16 %v52
    %v85 = vunpack.c.l.b16 %v53
    %v86 = vunpack.c.l.b16 %v54
    %v87 = vunpack.c.l.b16 %v55
    %v88 = vpack.c.b16 %v85, %v84
    %v89 = vpack.c.b16 %v87, %v86
    %vm90 = vcmask 130048
    %v92 = vsel %vm90, %v88, 0
    %v95 = vsel %vm90, %v89, 0
    %v98 = vsel %vm90, %v44, 0
    %v101 = vsel %vm90, %v45, 0
    %v104 = vsel %vm90, %v46, 0
    %v107 = vsel %vm90, %v47, 0
    %v110 = vsel %vm90, %v48, 0
    %v113 = vsel %vm90, %v49, 0
    %v116 = vsel %vm90, %v50, 0
    %v119 = vsel %vm90, %v51, 0
    %121 = vmatprep.subr.bf16.mxu0 0
    %122 = vmatpush1.bf16.xpose.msra.mxu0 %v98
    %123 = vmatprep.subr.bf16.mxu0 0
    %124 = vmatpush1.bf16.xpose.msra.mxu0 %v101
    %125 = vmatprep.subr.bf16.mxu0 0
    %126 = vmatpush1.bf16.xpose.msra.mxu0 %v104
    %127 = vmatprep.subr.bf16.mxu0 0
    %128 = vmatpush1.bf16.xpose.msra.mxu0 %v107
    %129 = vmatprep.subr.bf16.mxu0 0
    %130 = vmatpush1.bf16.xpose.msra.mxu0 %v110
    %131 = vmatprep.subr.bf16.mxu0 0
    %132 = vmatpush1.bf16.xpose.msra.mxu0 %v113
    %133 = vmatprep.subr.bf16.mxu0 0
    %134 = vmatpush1.bf16.xpose.msra.mxu0 %v116
    %135 = vmatprep.subr.bf16.mxu0 0
    %136 = vmatpush1.bf16.xpose.msra.mxu0 %v119
    %137 = vmatprep.subr.bf16.mxu0 0
    %138 = vmatpush1.bf16.xpose.msra.mxu0 0
    %139 = vmatprep.subr.bf16.mxu0 0
    %140 = vmatpush1.bf16.xpose.msra.mxu0 0
    %141 = vmatprep.subr.bf16.mxu0 0
    %142 = vmatpush1.bf16.xpose.msra.mxu0 0
    %143 = vmatprep.subr.bf16.mxu0 0
    %144 = vmatpush1.bf16.xpose.msra.mxu0 0
    %145 = vmatprep.subr.bf16.mxu0 0
    %146 = vmatpush1.bf16.xpose.msra.mxu0 0
    %147 = vmatprep.subr.bf16.mxu0 0
    %148 = vmatpush1.bf16.xpose.msra.mxu0 0
    %149 = vmatprep.subr.bf16.mxu0 0
    %150 = vmatpush1.bf16.xpose.msra.mxu0 0
    %151 = vmatprep.subr.bf16.mxu0 0
    %152 = vmatpush1.bf16.xpose.msra.mxu0 0
    %153 = vmatprep.mubr.bf16.mxu0 0
    %154 = vmatmul.mubr.bf16.gmra.mrb[0].mxu0 %v92
    %v155 = vpop.f32.mrb[0].mxu0
    %v156 = vadd.f32 %v63, %v155
    %v157 = vpop.f32.mrb[0].mxu0
    %v158 = vpop.f32.mrb[0].mxu0
    %v159 = vadd.f32 %v68, %v158
    %v160 = vpop.f32.mrb[0].mxu0
    %161 = vmatprep.mubr.bf16.mxu0 0
    %162 = vmatmul.mubr.bf16.gmra.mrb[0].mxu0 %v95
    %v163 = vpop.f32.mrb[0].mxu0
    %v164 = vadd.f32 %v73, %v163
    %v165 = vpop.f32.mrb[0].mxu0
    %v166 = vpop.f32.mrb[0].mxu0
    %v167 = vadd.f32 %v78, %v166
    %v168 = vpop.f32.mrb[0].mxu0
    %169 = vdwg.mxu0
    %v170 = vtanh.pop %v156
    %v171 = vtanh.pop %v159
    %v172 = vtanh.pop %v164
    %v173 = vtanh.pop %v167
    %v174 = vld [vmem:[%s3] sm:$0xf]
    %v175 = vld [vmem:[%s3 + $0x4] sm:$0xf]
    %v176 = vld [vmem:[%s3 + $0x8] sm:$0xf]
    %v177 = vld [vmem:[%s3 + $0xc] sm:$0x7]
    %v178 = vld [vmem:[%s4] sm:$0xff]
    %v179 = vld [vmem:[%s4 + $0x8] sm:$0xff]
    %v180 = vld [vmem:[%s4 + $0x10] sm:$0xff]
    %v181 = vld [vmem:[%s4 + $0x18] sm:$0x3f]
    %v182 = vpack.c.bf16 %v171, %v170
    %v183 = vpack.c.bf16 %v173, %v172
    %185 = vset.pattern.permute.xlu0 0
    %186 = vperm.xlu0 %185, %v178
    %v187 = vpop.permute.xlu0 %186
    %190 = vset.pattern.permute.xlu0 0
    %191 = vperm.xlu0 %190, %v179
    %v192 = vpop.permute.xlu0 %191
    %195 = vset.pattern.permute.xlu0 0
    %196 = vperm.xlu0 %195, %v180
    %v197 = vpop.permute.xlu0 %196
    %200 = vset.pattern.permute.xlu0 0
    %201 = vperm.xlu0 %200, %v181
    %v202 = vpop.permute.xlu0 %201
    %v208 = vunpack.c.l.b16 %v174
    %v209 = vunpack.c.l.b16 %v175
    %v210 = vunpack.c.l.b16 %v176
    %v211 = vunpack.c.l.b16 %v177
    %v212 = vpack.c.b16 %v209, %v208
    %v213 = vpack.c.b16 %v211, %v210
    %vm214 = vcmask 244736
    %v216 = vsel %vm214, %v212, 0
    %v219 = vsel %vm214, %v213, 0
    %vm221 = vcmask 1046528
    %v223 = vsel %vm221, %v183, 0
    %225 = vmatprep.subr.bf16.mxu0 0
    %226 = vmatpush1.bf16.msra.mxu0 %v182
    %227 = vmatprep.subr.bf16.mxu0 0
    %228 = vmatpush1.bf16.msra.mxu0 %v223
    %229 = vmatprep.subr.bf16.mxu0 0
    %230 = vmatpush1.bf16.msra.mxu0 0
    %231 = vmatprep.subr.bf16.mxu0 0
    %232 = vmatpush1.bf16.msra.mxu0 0
    %233 = vmatprep.subr.bf16.mxu0 0
    %234 = vmatpush1.bf16.msra.mxu0 0
    %235 = vmatprep.subr.bf16.mxu0 0
    %236 = vmatpush1.bf16.msra.mxu0 0
    %237 = vmatprep.subr.bf16.mxu0 0
    %238 = vmatpush1.bf16.msra.mxu0 0
    %239 = vmatprep.subr.bf16.mxu0 0
    %240 = vmatpush1.bf16.msra.mxu0 0
    %241 = vmatprep.subr.bf16.mxu0 0
    %242 = vmatpush1.bf16.msra.mxu0 0
    %243 = vmatprep.subr.bf16.mxu0 0
    %244 = vmatpush1.bf16.msra.mxu0 0
    %245 = vmatprep.subr.bf16.mxu0 0
    %246 = vmatpush1.bf16.msra.mxu0 0
    %247 = vmatprep.subr.bf16.mxu0 0
    %248 = vmatpush1.bf16.msra.mxu0 0
    %249 = vmatprep.subr.bf16.mxu0 0
    %250 = vmatpush1.bf16.msra.mxu0 0
    %251 = vmatprep.subr.bf16.mxu0 0
    %252 = vmatpush1.bf16.msra.mxu0 0
    %253 = vmatprep.subr.bf16.mxu0 0
    %254 = vmatpush1.bf16.msra.mxu0 0
    %255 = vmatprep.subr.bf16.mxu0 0
    %256 = vmatpush1.bf16.msra.mxu0 0
    %257 = vmatprep.mubr.bf16.mxu0 0
    %258 = vmatmul.mubr.bf16.gmra.mrb[0].mxu0 %v216
    %v259 = vpop.f32.mrb[0].mxu0
    %v260 = vadd.f32 %v187, %v259
    %v261 = vpop.f32.mrb[0].mxu0
    %v262 = vpop.f32.mrb[0].mxu0
    %v263 = vadd.f32 %v192, %v262
    %v264 = vpop.f32.mrb[0].mxu0
    %265 = vmatprep.mubr.bf16.mxu0 0
    %266 = vmatmul.mubr.bf16.gmra.mrb[0].mxu0 %v219
    %v267 = vpop.f32.mrb[0].mxu0
    %v268 = vadd.f32 %v197, %v267
    %v269 = vpop.f32.mrb[0].mxu0
    %v270 = vpop.f32.mrb[0].mxu0
    %v271 = vadd.f32 %v202, %v270
    %v272 = vpop.f32.mrb[0].mxu0
    %273 = vdwg.mxu0
    %v274 = vtanh.pop %v260
    %v275 = vtanh.pop %v263
    %v276 = vtanh.pop %v268
    %v277 = vtanh.pop %v271
    %v278 = vld [vmem:[%s5] sm:$0x3]
    %v279 = vld [vmem:[%s6] sm:$0xf]
    %v280 = vpack.c.bf16 %v275, %v274
    %v281 = vpack.c.bf16 %v277, %v276
    %283 = vset.pattern.permute.xlu0 0
    %284 = vperm.xlu0 %283, %v279
    %v285 = vpop.permute.xlu0 %284
    %v288 = vsel %vm214, %v278, 0
    %v291 = vsel %vm221, %v281, 0
    %293 = vmatprep.subr.bf16.mxu0 0
    %294 = vmatpush1.bf16.msra.mxu0 %v280
    %295 = vmatprep.subr.bf16.mxu0 0
    %296 = vmatpush1.bf16.msra.mxu0 %v291
    %297 = vmatprep.subr.bf16.mxu0 0
    %298 = vmatpush1.bf16.msra.mxu0 0
    %299 = vmatprep.subr.bf16.mxu0 0
    %300 = vmatpush1.bf16.msra.mxu0 0
    %301 = vmatprep.subr.bf16.mxu0 0
    %302 = vmatpush1.bf16.msra.mxu0 0
    %303 = vmatprep.subr.bf16.mxu0 0
    %304 = vmatpush1.bf16.msra.mxu0 0
    %305 = vmatprep.subr.bf16.mxu0 0
    %306 = vmatpush1.bf16.msra.mxu0 0
    %307 = vmatprep.subr.bf16.mxu0 0
    %308 = vmatpush1.bf16.msra.mxu0 0
    %309 = vmatprep.subr.bf16.mxu0 0
    %310 = vmatpush1.bf16.msra.mxu0 0
    %311 = vmatprep.subr.bf16.mxu0 0
    %312 = vmatpush1.bf16.msra.mxu0 0
    %313 = vmatprep.subr.bf16.mxu0 0
    %314 = vmatpush1.bf16.msra.mxu0 0
    %315 = vmatprep.subr.bf16.mxu0 0
    %316 = vmatpush1.bf16.msra.mxu0 0
    %317 = vmatprep.subr.bf16.mxu0 0
    %318 = vmatpush1.bf16.msra.mxu0 0
    %319 = vmatprep.subr.bf16.mxu0 0
    %320 = vmatpush1.bf16.msra.mxu0 0
    %321 = vmatprep.subr.bf16.mxu0 0
    %322 = vmatpush1.bf16.msra.mxu0 0
    %323 = vmatprep.subr.bf16.mxu0 0
    %324 = vmatpush1.bf16.msra.mxu0 0
    %325 = vmatprep.mubr.bf16.mxu0 0
    %326 = vmatmul.mubr.bf16.gmra.mrb[0].mxu0 %v288
    %v327 = vpop.f32.mrb[0].mxu0
    %v328 = vadd.f32 %v285, %v327
    %v329 = vpop.f32.mrb[0].mxu0
    %v330 = vpop.f32.mrb[0].mxu0
    %v331 = vpop.f32.mrb[0].mxu0
    %332 = vdwg.mxu0
    %v333 = vtanh.pop %v328
    %334 = vst [vmem:[#allocation2] sm:$0xf] %v333
    // Predicated region
    $region30: #{tpu_custom_call.1} parent=1 // pred_check
      _
    $region31: #{tpu_custom_call.1} parent=1 // pred_check_branch
      %336 = sbr.rel (0) target = $region33
    $region32: #{tpu_custom_call.1} parent=1 // pred_region
      %s338 = ssub.s32 64, 64
      %339 = vsyncadd [#allocation3], %s338
      %s341 = sshll.u32 [#allocation2], 4
      %s342 = int_to_ptr.vmem [resolvable:$true] %s341
      %344 = dma.vmem_to_hbm [thread:$0]  %s342, 64, %s7, [#allocation3]
    $region33: #{tpu_custom_call.1} parent=1 // pred_fallthru
      _
    // Predicated region
    $region34: #{tpu_custom_call.1} parent=1 // pred_check
      _
    $region35: #{tpu_custom_call.1} parent=1 // pred_check_branch
      %346 = sbr.rel (0) target = $region37
    $region36: #{tpu_custom_call.1} parent=1 // pred_region
      %347 = dma.done [#allocation3], 64
    $region37: #{tpu_custom_call.1} parent=1 // pred_fallthru
      _
    %348 = vsyncpa [#allocation3], 1

</llo_original>
